<compile_context>
chip_gen: v6e
topology: v6e:2x2x1
jax: 0.10.0
libtpu: 0.0.40
codegen_flags: <defaults>
</compile_context>

<pallas_src>
import jax
import jax.numpy as jnp
from jax.experimental import pallas as pl
from jax.experimental.pallas import tpu as pltpu

NUM_EMOTIONS = 32
LANE = 128  # lane-dense padded output width


def emotion_head_kernel(ids_ref, h_hbm, w_hbm, b_hbm, out_ref,
                        gathered, w_vmem, b_vmem, row_sems, wb_sems):
    """ids_ref: SMEM (B,) int32; h_hbm: HBM (B, S, D); w_hbm: HBM (D, 128);
    b_hbm: HBM (1, 128); out_ref: VMEM (B, 128);
    gathered: VMEM (B, D); w_vmem: VMEM (D, 128); b_vmem: VMEM (1, 128);
    row_sems: DMA sems (B,); wb_sems: DMA sems (2,)."""
    B = gathered.shape[0]

    # Start the weight/bias loads first (largest transfers) so they overlap the
    # row gathers instead of serializing ahead of the body in a BlockSpec prologue.
    w_cp = pltpu.make_async_copy(w_hbm, w_vmem, wb_sems.at[0])
    b_cp = pltpu.make_async_copy(b_hbm, b_vmem, wb_sems.at[1])
    w_cp.start()
    b_cp.start()

    # Gather: one (1, D) row DMA per batch element, HBM -> VMEM.  All scalar id
    # reads happen in this loop, before any DMA wait.
    @pl.loop(0, B)
    def _(b):
        pltpu.make_async_copy(
            h_hbm.at[b, pl.ds(ids_ref[b], 1), :],   # selected (1, D) row in HBM
            gathered.at[pl.ds(b, 1), :],            # row b of the VMEM scratch
            row_sems.at[b],
        ).start()

    # Wait for all row gathers (descriptor only needs matching shapes for the wait).
    @pl.loop(0, B)
    def _(b):
        pltpu.make_async_copy(
            h_hbm.at[0, pl.ds(0, 1), :],
            gathered.at[pl.ds(b, 1), :],
            row_sems.at[b],
        ).wait()
    w_cp.wait()
    b_cp.wait()

    # Dropout2d is identity in eval/inference mode.
    # TODO(synk): training-mode channel dropout (Dropout2d) not implemented.

    # One batched (B, D) @ (D, 128) matmul on the MXU, lane-dense output + bias.
    logits = jnp.dot(gathered[...], w_vmem[...], preferred_element_type=jnp.float32)
    out_ref[...] = (logits + b_vmem[...]).astype(out_ref.dtype)


def prepare_emotion_head_params(weight, bias, param_dtype=jnp.float32):
    """One-time parameter prep (do at load time, cache the results).

    weight: (32, D) in PyTorch nn.Linear layout; bias: (32,).
    Returns (w_pad (D, 128), b_pad (1, 128)).  On v6e/v7x pass
    param_dtype=jnp.bfloat16 (matching bf16 activations) for an MXU-native matmul.
    """
    D = weight.shape[1]
    w_pad = jnp.zeros((D, LANE), dtype=param_dtype)
    w_pad = w_pad.at[:, :NUM_EMOTIONS].set(weight.T.astype(param_dtype))
    b_pad = jnp.zeros((1, LANE), dtype=jnp.float32)
    b_pad = b_pad.at[:, :NUM_EMOTIONS].set(bias.astype(jnp.float32))
    return w_pad, b_pad


@jax.jit
def bart_emotion_choice_head(hidden_states, mc_token_ids, w_pad, b_pad):
    """hidden_states: (B, S, D); mc_token_ids: (B,) int;
    w_pad/b_pad: from prepare_emotion_head_params.  Returns (B, 32) f32 logits."""
    B, S, D = hidden_states.shape

    # torch.gather would raise on an out-of-range index; here an OOB id would be a
    # silent/faulting OOB DMA, so clamp defensively.
    ids = jnp.clip(mc_token_ids.astype(jnp.int32), 0, S - 1)

    out_padded = pl.pallas_call(
        emotion_head_kernel,
        out_shape=jax.ShapeDtypeStruct((B, LANE), jnp.float32),
        in_specs=[
            pl.BlockSpec(memory_space=pltpu.MemorySpace.SMEM),  # mc_token_ids
            pl.BlockSpec(memory_space=pl.ANY),                  # hidden_states (HBM)
            pl.BlockSpec(memory_space=pl.ANY),                  # w_pad (HBM, manual DMA)
            pl.BlockSpec(memory_space=pl.ANY),                  # b_pad (HBM, manual DMA)
        ],
        out_specs=pl.BlockSpec(memory_space=pltpu.MemorySpace.VMEM),
        scratch_shapes=[
            pltpu.VMEM((B, D), hidden_states.dtype),            # gathered rows
            pltpu.VMEM((D, LANE), w_pad.dtype),                  # resident weight
            pltpu.VMEM((1, LANE), jnp.float32),                  # resident bias
            pltpu.SemaphoreType.DMA((B,)),                       # per-row DMA sems
            pltpu.SemaphoreType.DMA((2,)),                       # weight/bias DMA sems
        ],
    )(ids, hidden_states, w_pad, b_pad)

    return out_padded[:, :NUM_EMOTIONS]


if __name__ == "__main__":
    # Small shapes consistent with the module: batch=8, seq=16, d_model=128.
    B, S, D = 8, 16, 128

    key = jax.random.PRNGKey(0)
    k_h, k_w, k_b, k_ids = jax.random.split(key, 4)

    hidden_states = jax.random.normal(k_h, (B, S, D), dtype=jnp.float32)
    mc_token_ids = jax.random.randint(k_ids, (B,), 0, S, dtype=jnp.int32)

    # Parameter init mirroring the module's __init__:
    #   nn.init.normal_(weight, std=0.02); nn.init.normal_(bias, 0)  (std=1)
    weight = 0.02 * jax.random.normal(k_w, (NUM_EMOTIONS, D), dtype=jnp.float32)
    bias = jax.random.normal(k_b, (NUM_EMOTIONS,), dtype=jnp.float32)

    # One-time parameter prep (cached across forward calls).
    w_pad, b_pad = prepare_emotion_head_params(weight, bias, param_dtype=jnp.float32)
    w_pad, b_pad = jax.block_until_ready((w_pad, b_pad))

    out = bart_emotion_choice_head(hidden_states, mc_token_ids, w_pad, b_pad)
    out = jax.block_until_ready(out)

    # Pure-JAX reference check.
    gathered_ref = hidden_states[jnp.arange(B), mc_token_ids, :]      # (B, D)
    ref = gathered_ref @ weight.T + bias                              # (B, 32)
    assert out.shape == (B, NUM_EMOTIONS)
    assert jnp.allclose(out, ref, atol=1e-5, rtol=1e-5)

    print("KERNEL_OK")
</pallas_src>

<mosaic_0001>
module attributes {stable_mosaic.version = 11 : i64} {
  func.func @emotion_head_kernel(%arg0: memref<8xi32, #tpu.memory_space<smem>>, %arg1: memref<8x16x128xf32, #tpu.memory_space<any>>, %arg2: memref<128x128xf32, #tpu.memory_space<any>>, %arg3: memref<1x128xf32, #tpu.memory_space<any>>, %arg4: memref<8x128xf32, #tpu.memory_space<vmem>>, %arg5: memref<8x128xf32, #tpu.memory_space<vmem>>, %arg6: memref<128x128xf32, #tpu.memory_space<vmem>>, %arg7: memref<1x128xf32, #tpu.memory_space<vmem>>, %arg8: memref<8x!tpu.dma_semaphore, #tpu.memory_space<semaphore_mem>>, %arg9: memref<2x!tpu.dma_semaphore, #tpu.memory_space<semaphore_mem>>) attributes {dimension_semantics = [], scalar_prefetch = 0 : i64, scratch_operands = 5 : i64, tpu.core_type = #tpu.core_type<tc>} {
    %c0_i32 = arith.constant 0 : i32
    %0 = tpu.memref_slice %arg9[%c0_i32] : memref<2x!tpu.dma_semaphore, #tpu.memory_space<semaphore_mem>> -> memref<1x!tpu.dma_semaphore, #tpu.memory_space<semaphore_mem>>
    %1 = tpu.memref_squeeze %0 : memref<1x!tpu.dma_semaphore, #tpu.memory_space<semaphore_mem>> -> memref<!tpu.dma_semaphore, #tpu.memory_space<semaphore_mem>>
    tpu.enqueue_dma source(%arg2 : memref<128x128xf32, #tpu.memory_space<any>>) target(%arg6 : memref<128x128xf32, #tpu.memory_space<vmem>>) target_semaphore(%1 : memref<!tpu.dma_semaphore, #tpu.memory_space<semaphore_mem>>)
    %c1_i32 = arith.constant 1 : i32
    %2 = tpu.memref_slice %arg9[%c1_i32] : memref<2x!tpu.dma_semaphore, #tpu.memory_space<semaphore_mem>> -> memref<1x!tpu.dma_semaphore, #tpu.memory_space<semaphore_mem>>
    %3 = tpu.memref_squeeze %2 : memref<1x!tpu.dma_semaphore, #tpu.memory_space<semaphore_mem>> -> memref<!tpu.dma_semaphore, #tpu.memory_space<semaphore_mem>>
    tpu.enqueue_dma source(%arg3 : memref<1x128xf32, #tpu.memory_space<any>>) target(%arg7 : memref<1x128xf32, #tpu.memory_space<vmem>>) target_semaphore(%3 : memref<!tpu.dma_semaphore, #tpu.memory_space<semaphore_mem>>)
    %c0_i32_0 = arith.constant 0 : i32
    %c8_i32 = arith.constant 8 : i32
    %4 = arith.addi %c0_i32_0, %c8_i32 : i32
    %c1_i32_1 = arith.constant 1 : i32
    scf.for %arg10 = %c0_i32_0 to %4 step %c1_i32_1  : i32 {
      %c1_i32_16 = arith.constant 1 : i32
      %17 = arith.muli %arg10, %c1_i32_16 : i32
      %c0_i32_17 = arith.constant 0 : i32
      %18 = arith.addi %c0_i32_17, %17 : i32
      %19 = arith.index_cast %18 : i32 to index
      %20 = memref.load %arg0[%19] : memref<8xi32, #tpu.memory_space<smem>>
      %c0_i32_18 = arith.constant 0 : i32
      %21 = tpu.memref_slice %arg1[%18, %20, %c0_i32_18] : memref<8x16x128xf32, #tpu.memory_space<any>> -> memref<1x1x128xf32, #tpu.memory_space<any>>
      %22 = tpu.memref_squeeze %21 : memref<1x1x128xf32, #tpu.memory_space<any>> -> memref<1x128xf32, #tpu.memory_space<any>>
      %c0_i32_19 = arith.constant 0 : i32
      %23 = tpu.memref_slice %arg5[%18, %c0_i32_19] : memref<8x128xf32, #tpu.memory_space<vmem>> -> memref<1x128xf32, #tpu.memory_space<vmem>>
      %24 = tpu.memref_slice %arg8[%18] : memref<8x!tpu.dma_semaphore, #tpu.memory_space<semaphore_mem>> -> memref<1x!tpu.dma_semaphore, #tpu.memory_space<semaphore_mem>>
      %25 = tpu.memref_squeeze %24 : memref<1x!tpu.dma_semaphore, #tpu.memory_space<semaphore_mem>> -> memref<!tpu.dma_semaphore, #tpu.memory_space<semaphore_mem>>
      tpu.enqueue_dma source(%22 : memref<1x128xf32, #tpu.memory_space<any>>) target(%23 : memref<1x128xf32, #tpu.memory_space<vmem>>) target_semaphore(%25 : memref<!tpu.dma_semaphore, #tpu.memory_space<semaphore_mem>>)
    }
    %c8_i32_2 = arith.constant 8 : i32
    %c0_i32_3 = arith.constant 0 : i32
    %c8_i32_4 = arith.constant 8 : i32
    %5 = arith.addi %c0_i32_3, %c8_i32_4 : i32
    %c1_i32_5 = arith.constant 1 : i32
    scf.for %arg10 = %c0_i32_3 to %5 step %c1_i32_5  : i32 {
      %c1_i32_16 = arith.constant 1 : i32
      %17 = arith.muli %arg10, %c1_i32_16 : i32
      %c0_i32_17 = arith.constant 0 : i32
      %18 = arith.addi %c0_i32_17, %17 : i32
      %c0_i32_18 = arith.constant 0 : i32
      %c0_i32_19 = arith.constant 0 : i32
      %c0_i32_20 = arith.constant 0 : i32
      %19 = tpu.memref_slice %arg1[%c0_i32_18, %c0_i32_19, %c0_i32_20] : memref<8x16x128xf32, #tpu.memory_space<any>> -> memref<1x1x128xf32, #tpu.memory_space<any>>
      %20 = tpu.memref_squeeze %19 : memref<1x1x128xf32, #tpu.memory_space<any>> -> memref<1x128xf32, #tpu.memory_space<any>>
      %c0_i32_21 = arith.constant 0 : i32
      %21 = tpu.memref_slice %arg5[%18, %c0_i32_21] : memref<8x128xf32, #tpu.memory_space<vmem>> -> memref<1x128xf32, #tpu.memory_space<vmem>>
      %22 = tpu.memref_slice %arg8[%18] : memref<8x!tpu.dma_semaphore, #tpu.memory_space<semaphore_mem>> -> memref<1x!tpu.dma_semaphore, #tpu.memory_space<semaphore_mem>>
      %23 = tpu.memref_squeeze %22 : memref<1x!tpu.dma_semaphore, #tpu.memory_space<semaphore_mem>> -> memref<!tpu.dma_semaphore, #tpu.memory_space<semaphore_mem>>
      tpu.wait_dma2 semaphore(%23 : memref<!tpu.dma_semaphore, #tpu.memory_space<semaphore_mem>>) src(%20 : memref<1x128xf32, #tpu.memory_space<any>>) dst(%21 : memref<1x128xf32, #tpu.memory_space<vmem>>)
    }
    %c8_i32_6 = arith.constant 8 : i32
    %c0_i32_7 = arith.constant 0 : i32
    %6 = tpu.memref_slice %arg9[%c0_i32_7] : memref<2x!tpu.dma_semaphore, #tpu.memory_space<semaphore_mem>> -> memref<1x!tpu.dma_semaphore, #tpu.memory_space<semaphore_mem>>
    %7 = tpu.memref_squeeze %6 : memref<1x!tpu.dma_semaphore, #tpu.memory_space<semaphore_mem>> -> memref<!tpu.dma_semaphore, #tpu.memory_space<semaphore_mem>>
    tpu.wait_dma2 semaphore(%7 : memref<!tpu.dma_semaphore, #tpu.memory_space<semaphore_mem>>) src(%arg2 : memref<128x128xf32, #tpu.memory_space<any>>) dst(%arg6 : memref<128x128xf32, #tpu.memory_space<vmem>>)
    %c1_i32_8 = arith.constant 1 : i32
    %8 = tpu.memref_slice %arg9[%c1_i32_8] : memref<2x!tpu.dma_semaphore, #tpu.memory_space<semaphore_mem>> -> memref<1x!tpu.dma_semaphore, #tpu.memory_space<semaphore_mem>>
    %9 = tpu.memref_squeeze %8 : memref<1x!tpu.dma_semaphore, #tpu.memory_space<semaphore_mem>> -> memref<!tpu.dma_semaphore, #tpu.memory_space<semaphore_mem>>
    tpu.wait_dma2 semaphore(%9 : memref<!tpu.dma_semaphore, #tpu.memory_space<semaphore_mem>>) src(%arg3 : memref<1x128xf32, #tpu.memory_space<any>>) dst(%arg7 : memref<1x128xf32, #tpu.memory_space<vmem>>)
    %c0 = arith.constant 0 : index
    %c0_9 = arith.constant 0 : index
    %10 = vector.load %arg5[%c0, %c0_9] : memref<8x128xf32, #tpu.memory_space<vmem>>, vector<8x128xf32>
    %c0_10 = arith.constant 0 : index
    %c0_11 = arith.constant 0 : index
    %11 = vector.load %arg6[%c0_10, %c0_11] : memref<128x128xf32, #tpu.memory_space<vmem>>, vector<128x128xf32>
    %cst = arith.constant dense<0.000000e+00> : vector<8x128xf32>
    %12 = tpu.matmul %10, %11, %cst {dimension_numbers = #tpu.dot_dimension_numbers<[1], [0], [0], [1], [0, 0, 1, 1], [], []>} : vector<8x128xf32>, vector<128x128xf32>, vector<8x128xf32> -> vector<8x128xf32>
    %c0_12 = arith.constant 0 : index
    %c0_13 = arith.constant 0 : index
    %13 = vector.load %arg7[%c0_12, %c0_13] : memref<1x128xf32, #tpu.memory_space<vmem>>, vector<1x128xf32>
    %14 = vector.broadcast %13 : vector<1x128xf32> to vector<8x128xf32>
    %15 = arith.addf %12, %14 : vector<8x128xf32>
    %c0_14 = arith.constant 0 : index
    %c0_15 = arith.constant 0 : index
    %16 = vector.load %arg4[%c0_14, %c0_15] : memref<8x128xf32, #tpu.memory_space<vmem>>, vector<8x128xf32>
    tpu.vector_store %arg4[%c0_14, %c0_15], %15 {strides = array<i32>} : memref<8x128xf32, #tpu.memory_space<vmem>>, vector<8x128xf32>,
    return
  }
}

</mosaic_0001>

<llo_original>
// kernel: bart_emotion_choice_head.1
$region0: #{bart_emotion_choice_head.1}
  #allocation0 [shape = 'u32[]', space=smem, size = 0x4, offset = 0x4, fixed_abs, tag = 'smem constant byte address 0x4 - core index']
  #allocation1 [shape = 'u32[144,128]{1,0:T(1,128)}', space=vmem, size = 0x12000, scoped, tag = 'internal scratch']
  #allocation2 [shape = 'f32[8,128]{1,0:T(8,128)}', space=vmem, size = 0x1000, scoped, tag = 'scratch operand']
  #allocation3 [shape = 'f32[128,128]{1,0:T(8,128)}', space=vmem, size = 0x10000, scoped, tag = 'scratch operand']
  #allocation4 [shape = 'f32[1,128]{1,0:T(1,128)}', space=vmem, size = 0x200, scoped, tag = 'scratch operand']
  #allocation5 [shape = 's32[8]{0}', space=sflag, size = 0x20, scoped, tag = 'scratch operand']
  #allocation6 [shape = 's32[2]{0}', space=sflag, size = 0x8, scoped, tag = 'scratch operand']
  #allocation11 [shape = 's32[]', space=sflag, size = 0x4, offset = 0, fixed_abs, tag = 'sflag constant byte address 0x0 - dummy sync flag']
  #allocation12 [shape = 's32[]', space=sflag, size = 0x4, offset = 0, fixed_abs, tag = 'sflag constant byte address 0x0 - dummy sync flag']
  #allocation13 [shape = 'u32[]', space=smem, size = 0x4, offset = 0x44, fixed_abs, tag = 'smem constant byte address 0x44 - assertion arg 0']
  #allocation14 [shape = 'u32[]', space=smem, size = 0x4, offset = 0x48, fixed_abs, tag = 'smem constant byte address 0x48 - assertion arg 1']
  #allocation15 [shape = 's32[]', space=sflag, size = 0x4, offset = 0, fixed_abs, tag = 'sflag constant byte address 0x0 - dummy sync flag']
  #allocation16 [shape = 's32[]', space=sflag, size = 0x4, offset = 0, fixed_abs, tag = 'sflag constant byte address 0x0 - dummy sync flag']
  #allocation17 [shape = 's32[]', space=sflag, size = 0x4, offset = 0, fixed_abs, tag = 'sflag constant byte address 0x0 - dummy sync flag']
  %s0 = inlined_call_operand.vmem [shape: s32[8], index: 0, kind: input, shape index: {}]
  %s1 = inlined_call_operand.hbm [shape: f32[8,16,128], index: 1, kind: input, shape index: {}]
  %s2 = inlined_call_operand.hbm [shape: f32[128,128], index: 2, kind: input, shape index: {}]
  %s3 = inlined_call_operand.vmem [shape: f32[1,128], index: 3, kind: input, shape index: {}]
  %s4 = inlined_call_operand.hbm [shape: f32[8,128], index: 4, kind: output, shape index: {}]
  %s5 = sld [smem:[#allocation0]]
  $region70: #{bart_emotion_choice_head.1} parent=0
    _
  %s7 = ssub.s32 1, %s5
  %s8 = scalar_select 0, %s7, %s5
  $region1: #{bart_emotion_choice_head.1} parent=0
    #allocation7 [shape = 'u8[512]{0}', space=smem, size = 0x200, scoped, tag = 'input window, operand 0, single buffered']
    #allocation8 [shape = 's32[1]{0}', space=sflag, size = 0x4, scoped, tag = 'scoped memory for bart_emotion_choice_head.1']
    #allocation9 [shape = 's32[1]{0}', space=sflag, size = 0x4, scoped, tag = 'scoped memory for bart_emotion_choice_head.1']
    #allocation10 [shape = 'u8[4096]{0}', space=vmem, size = 0x1000, scoped, tag = 'output window, operand 0, single buffered']
    %9 = vsyncpa [#allocation9], 0
    %10 = vsyncpa [#allocation8], 0
    // Predicated region
    $region2: #{bart_emotion_choice_head.1} parent=1 // pred_check
      _
    $region3: #{bart_emotion_choice_head.1} parent=1 // pred_check_branch
      %12 = sbr.rel (0) target = $region5
    $region4: #{bart_emotion_choice_head.1} parent=1 // pred_region
      %s14 = ssub.s32 16, 16
      %15 = vsyncadd [#allocation9], %s14
      %s17 = sshll.u32 %s0, 4
      %s18 = int_to_ptr.vmem [resolvable:$true] %s17
      %20 = dma.vmem_to_smem %s18, 16, [#allocation7], [#allocation9]
    $region5: #{bart_emotion_choice_head.1} parent=1 // pred_fallthru
      _
    // Predicated region
    $region6: #{bart_emotion_choice_head.1} parent=1 // pred_check
      _
    $region7: #{bart_emotion_choice_head.1} parent=1 // pred_check_branch
      %22 = sbr.rel (0) target = $region9
    $region8: #{bart_emotion_choice_head.1} parent=1 // pred_region
      %23 = dma.done [#allocation9], 16
    $region9: #{bart_emotion_choice_head.1} parent=1 // pred_fallthru
      _
    %24 = sfence
    // Predicated region
    $region10: #{bart_emotion_choice_head.1} parent=1 // pred_check
      _
    $region11: #{bart_emotion_choice_head.1} parent=1 // pred_check_branch
      %26 = sbr.rel target = $region13
    $region12: #{bart_emotion_choice_head.1} parent=1 // pred_region
      %27 = sst [smem:[#allocation13]] [#allocation12]
      %28 = sst [smem:[#allocation14]] [#allocation11]
    $region13: #{bart_emotion_choice_head.1} parent=1 // pred_fallthru
      _
    %30 = shalt.err (0)
    %s32 = sshll.u32 [#allocation3], 4
    %s33 = int_to_ptr.vmem [resolvable:$true] %s32
    %35 = dma.hbm_to_vmem [thread:$0]  %s2, 2048, %s33, [#allocation6]
    %s36 = scalar_lea.sflag [#allocation6], 1
    %p38 = scmp.lt.u32.totalorder 1, 8
    %p39 = pneg %p38
    // Predicated region
    $region14: #{bart_emotion_choice_head.1} parent=1 // pred_check
      _
    $region15: #{bart_emotion_choice_head.1} parent=1 // pred_check_branch
      %41 = sbr.rel (%p38) target = $region17
    $region16: #{bart_emotion_choice_head.1} parent=1 // pred_region
      %s57 = sand.u32 1, 7
      %p58 = scmp.eq.s32.totalorder %s57, 0
      %p59 = pneg %p58
      // Predicated region
      $region29: #{bart_emotion_choice_head.1} parent=16 // pred_check
        _
      $region30: #{bart_emotion_choice_head.1} parent=16 // pred_check_branch
        %61 = sbr.rel (%p58) target = $region32
      $region31: #{bart_emotion_choice_head.1} parent=16 // pred_region
        %s62 = sand.u32 1, 7
        %s63 = ssub.s32 1, %s62
        %s64 = scalar_lea.vmem %s3, %s63
        %s65 = ssub.s32 1, %s62
        %s66 = scalar_lea.vmem [#allocation4], %s65
        %s67 = sshll.u32 1, %s62
        %s68 = ssub.s32 %s67, 1
        loop: start=0, step=1, limit=1
        $region33: #{bart_emotion_choice_head.1} parent=31 // loop_pre_header
          _
        $region34: #{bart_emotion_choice_head.1} parent=31 // loop_header
          %s70 = sphi 0, %s74
          %p71 = scmp.ge.s32.totalorder %s70, 1
          %s75 = sphi %s64, %s64
          %s76 = sphi %s66, %s66
        $region35: #{bart_emotion_choice_head.1} parent=31 // loop_header_branch
          %73 = sbr.rel (%p71) target = $region39
        $region36: #{bart_emotion_choice_head.1} parent=31 // loop_body
          %v77 = vld [vmem:[%s75] sm:%s68]
          %78 = vst [vmem:[%s76] sm:%s68] %v77
        $region37: #{bart_emotion_choice_head.1} parent=31 // loop_footer
          %s74 = sadd.s32 1, %s70
        $region38: #{bart_emotion_choice_head.1} parent=31 // loop_footer_branch
          %69 = sbr.rel target = $region34
        $region39: #{bart_emotion_choice_head.1} parent=31 // loop_exit
          _
      $region32: #{bart_emotion_choice_head.1} parent=16 // pred_fallthru
        _
    $region17: #{bart_emotion_choice_head.1} parent=1 // pred_fallthru
      _
    // Predicated region
    $region18: #{bart_emotion_choice_head.1} parent=1 // pred_check
      %p42 = pneg %p38
    $region19: #{bart_emotion_choice_head.1} parent=1 // pred_check_branch
      %44 = sbr.rel (%p42) target = $region21
    $region20: #{bart_emotion_choice_head.1} parent=1 // pred_region
      %s45 = sshll.u32 1, 1
      %s46 = ssub.s32 %s45, 1
      loop: start=0, step=1, limit=1
      $region22: #{bart_emotion_choice_head.1} parent=20 // loop_pre_header
        _
      $region23: #{bart_emotion_choice_head.1} parent=20 // loop_header
        %s48 = sphi 0, %s52
        %p49 = scmp.ge.s32.totalorder %s48, 1
        %s53 = sphi %s3, %s3
        %s54 = sphi [#allocation4], [#allocation4]
      $region24: #{bart_emotion_choice_head.1} parent=20 // loop_header_branch
        %51 = sbr.rel (%p49) target = $region28
      $region25: #{bart_emotion_choice_head.1} parent=20 // loop_body
        %v55 = vld [vmem:[%s53] sm:%s46]
        %56 = vst [vmem:[%s54] sm:%s46] %v55
      $region26: #{bart_emotion_choice_head.1} parent=20 // loop_footer
        %s52 = sadd.s32 1, %s48
      $region27: #{bart_emotion_choice_head.1} parent=20 // loop_footer_branch
        %47 = sbr.rel target = $region23
      $region28: #{bart_emotion_choice_head.1} parent=20 // loop_exit
        _
    $region21: #{bart_emotion_choice_head.1} parent=1 // pred_fallthru
      _
    // Predicated region
    $region40: #{bart_emotion_choice_head.1} parent=1 // pred_check
      _
    $region41: #{bart_emotion_choice_head.1} parent=1 // pred_check_branch
      %81 = sbr.rel (0) target = $region43
    $region42: #{bart_emotion_choice_head.1} parent=1 // pred_region
      %82 = vsyncadd %s36, 16
    $region43: #{bart_emotion_choice_head.1} parent=1 // pred_fallthru
      _
    loop: start=0, step=1, limit=8
    $region44: #{bart_emotion_choice_head.1} parent=1 // loop_pre_header
      _
    $region45: #{bart_emotion_choice_head.1} parent=1 // loop_header
      %s84 = sphi 0, %s88
      %p85 = scmp.ge.s32.totalorder %s84, 8
    $region46: #{bart_emotion_choice_head.1} parent=1 // loop_header_branch
      %87 = sbr.rel (%p85) target = $region50
    $region47: #{bart_emotion_choice_head.1} parent=1 // loop_body
      %s89 = sld [smem:[#allocation7 + %s84]]
      %s90 = smul.u32 %s84, 16
      %s91 = sadd.s32 %s89, %s90
      %s92 = smul.addr %s91, 16
      %s93 = scalar_lea.hbm %s1, %s92
      %s94 = scalar_lea.vmem [#allocation2], %s84
      %s95 = scalar_lea.sflag [#allocation5], %s84
      // Predicated region
      $region51: #{bart_emotion_choice_head.1} parent=47 // pred_check
        _
      $region52: #{bart_emotion_choice_head.1} parent=47 // pred_check_branch
        %97 = sbr.rel target = $region54
      $region53: #{bart_emotion_choice_head.1} parent=47 // pred_region
        %98 = sst [smem:[#allocation13]] [#allocation17]
        %99 = sst [smem:[#allocation14]] [#allocation16]
      $region54: #{bart_emotion_choice_head.1} parent=47 // pred_fallthru
        _
      %101 = shalt.err (0)
      %s103 = sshll.u32 %s94, 4
      %s104 = int_to_ptr.vmem [resolvable:$true] %s103
      %106 = dma.hbm_to_vmem [thread:$0]  %s93, 16, %s104, %s95
    $region48: #{bart_emotion_choice_head.1} parent=1 // loop_footer
      %s88 = sadd.s32 1, %s84
    $region49: #{bart_emotion_choice_head.1} parent=1 // loop_footer_branch
      %83 = sbr.rel target = $region45
    $region50: #{bart_emotion_choice_head.1} parent=1 // loop_exit
      _
    loop: start=0, step=1, limit=8
    $region55: #{bart_emotion_choice_head.1} parent=1 // loop_pre_header
      _
    $region56: #{bart_emotion_choice_head.1} parent=1 // loop_header
      %s108 = sphi 0, %s112
      %p109 = scmp.ge.s32.totalorder %s108, 8
    $region57: #{bart_emotion_choice_head.1} parent=1 // loop_header_branch
      %111 = sbr.rel (%p109) target = $region61
    $region58: #{bart_emotion_choice_head.1} parent=1 // loop_body
      %s113 = scalar_lea.sflag [#allocation5], %s108
      %s114 = smul.u32 1, 1
      %s115 = sshll.u32 %s114, 4
      %116 = dma.done %s113, %s115
    $region59: #{bart_emotion_choice_head.1} parent=1 // loop_footer
      %s112 = sadd.s32 1, %s108
    $region60: #{bart_emotion_choice_head.1} parent=1 // loop_footer_branch
      %107 = sbr.rel target = $region56
    $region61: #{bart_emotion_choice_head.1} parent=1 // loop_exit
      _
    %s117 = smul.u32 128, 1
    %s118 = sshll.u32 %s117, 4
    %119 = dma.done [#allocation6], %s118
    %s120 = smul.u32 1, 1
    %s121 = sshll.u32 %s120, 4
    %122 = dma.done %s36, %s121
    %v123 = vld [vmem:[#allocation2] sm:$0xff]
    %v124 = vld [vmem:[#allocation3] sm:$0xff]
    %v125 = vld [vmem:[#allocation3 + $0x8] sm:$0xff]
    %v126 = vld [vmem:[#allocation3 + $0x10] sm:$0xff]
    %v127 = vld [vmem:[#allocation3 + $0x18] sm:$0xff]
    %v128 = vld [vmem:[#allocation3 + $0x20] sm:$0xff]
    %v129 = vld [vmem:[#allocation3 + $0x28] sm:$0xff]
    %v130 = vld [vmem:[#allocation3 + $0x30] sm:$0xff]
    %v131 = vld [vmem:[#allocation3 + $0x38] sm:$0xff]
    %v132 = vld [vmem:[#allocation3 + $0x40] sm:$0xff]
    %v133 = vld [vmem:[#allocation3 + $0x48] sm:$0xff]
    %v134 = vld [vmem:[#allocation3 + $0x50] sm:$0xff]
    %v135 = vld [vmem:[#allocation3 + $0x58] sm:$0xff]
    %v136 = vld [vmem:[#allocation3 + $0x60] sm:$0xff]
    %v137 = vld [vmem:[#allocation3 + $0x68] sm:$0xff]
    %v138 = vld [vmem:[#allocation3 + $0x70] sm:$0xff]
    %v139 = vld [vmem:[#allocation3 + $0x78] sm:$0xff]
    %v140 = vld [vmem:[#allocation4] sm:$0x1]
    %v142 = vlaneseq
    %v143 = vshrl.u32 %v142, 7
    %v144 = vsub.s32 0, %v143
    %v145 = vrot.slane %v140, %v144
    %147 = vmatprep.subr.mxu0 0.0
    %148 = vmatpush1.msra.mxu0 %v139
    %149 = vmatprep.subr.mxu0 0.0
    %150 = vmatpush1.msra.mxu0 %v138
    %151 = vmatprep.subr.mxu0 0.0
    %152 = vmatpush1.msra.mxu0 %v137
    %153 = vmatprep.subr.mxu0 0.0
    %154 = vmatpush1.msra.mxu0 %v136
    %155 = vmatprep.subr.mxu0 0.0
    %156 = vmatpush1.msra.mxu0 %v135
    %157 = vmatprep.subr.mxu0 0.0
    %158 = vmatpush1.msra.mxu0 %v134
    %159 = vmatprep.subr.mxu0 0.0
    %160 = vmatpush1.msra.mxu0 %v133
    %161 = vmatprep.subr.mxu0 0.0
    %162 = vmatpush1.msra.mxu0 %v132
    %163 = vmatprep.subr.mxu0 0.0
    %164 = vmatpush1.msra.mxu0 %v131
    %165 = vmatprep.subr.mxu0 0.0
    %166 = vmatpush1.msra.mxu0 %v130
    %167 = vmatprep.subr.mxu0 0.0
    %168 = vmatpush1.msra.mxu0 %v129
    %169 = vmatprep.subr.mxu0 0.0
    %170 = vmatpush1.msra.mxu0 %v128
    %171 = vmatprep.subr.mxu0 0.0
    %172 = vmatpush1.msra.mxu0 %v127
    %173 = vmatprep.subr.mxu0 0.0
    %174 = vmatpush1.msra.mxu0 %v126
    %175 = vmatprep.subr.mxu0 0.0
    %176 = vmatpush1.msra.mxu0 %v125
    %177 = vmatprep.subr.mxu0 0.0
    %178 = vmatpush1.msra.mxu0 %v124
    %179 = vmatprep.subr.mxu0 0.0
    %180 = vmatpush2.msra.mxu0 0.0
    %181 = vmatprep.subr.mxu0 0.0
    %182 = vmatpush2.msra.mxu0 0.0
    %183 = vmatprep.subr.mxu0 0.0
    %184 = vmatpush2.msra.mxu0 0.0
    %185 = vmatprep.subr.mxu0 0.0
    %186 = vmatpush2.msra.mxu0 0.0
    %187 = vmatprep.subr.mxu0 0.0
    %188 = vmatpush2.msra.mxu0 0.0
    %189 = vmatprep.subr.mxu0 0.0
    %190 = vmatpush2.msra.mxu0 0.0
    %191 = vmatprep.subr.mxu0 0.0
    %192 = vmatpush2.msra.mxu0 0.0
    %193 = vmatprep.subr.mxu0 0.0
    %194 = vmatpush2.msra.mxu0 0.0
    %195 = vmatprep.subr.mxu0 0.0
    %196 = vmatpush2.msra.mxu0 0.0
    %197 = vmatprep.subr.mxu0 0.0
    %198 = vmatpush2.msra.mxu0 0.0
    %199 = vmatprep.subr.mxu0 0.0
    %200 = vmatpush2.msra.mxu0 0.0
    %201 = vmatprep.subr.mxu0 0.0
    %202 = vmatpush2.msra.mxu0 0.0
    %203 = vmatprep.subr.mxu0 0.0
    %204 = vmatpush2.msra.mxu0 0.0
    %205 = vmatprep.subr.mxu0 0.0
    %206 = vmatpush2.msra.mxu0 0.0
    %207 = vmatprep.subr.mxu0 0.0
    %208 = vmatpush2.msra.mxu0 0.0
    %209 = vmatprep.subr.mxu0 0.0
    %210 = vmatpush2.msra.mxu0 0.0
    %211 = vmatprep.mubr.f32.mxu0 0.0
    %212 = vmatmul.mubr.f32.gmra.mxu0 %v123
    %v213 = vpop.f32.mrf.mxu0
    %v214 = vadd.f32 %v145, %v213
    %v215 = vpop.f32.mrf.mxu0
    %216 = vdwg.mxu0
    %217 = vst [vmem:[#allocation10] sm:$0xff] %v214
    // Predicated region
    $region62: #{bart_emotion_choice_head.1} parent=1 // pred_check
      _
    $region63: #{bart_emotion_choice_head.1} parent=1 // pred_check_branch
      %219 = sbr.rel (0) target = $region65
    $region64: #{bart_emotion_choice_head.1} parent=1 // pred_region
      %s221 = ssub.s32 128, 128
      %222 = vsyncadd [#allocation8], %s221
      %s224 = sshll.u32 [#allocation10], 4
      %s225 = int_to_ptr.vmem [resolvable:$true] %s224
      %227 = dma.vmem_to_hbm [thread:$0]  %s225, 128, %s4, [#allocation8]
    $region65: #{bart_emotion_choice_head.1} parent=1 // pred_fallthru
      _
    // Predicated region
    $region66: #{bart_emotion_choice_head.1} parent=1 // pred_check
      _
    $region67: #{bart_emotion_choice_head.1} parent=1 // pred_check_branch
      %229 = sbr.rel (0) target = $region69
    $region68: #{bart_emotion_choice_head.1} parent=1 // pred_region
      %230 = dma.done [#allocation8], 128
    $region69: #{bart_emotion_choice_head.1} parent=1 // pred_fallthru
      _
    %231 = vsyncpa [#allocation8], 1
    %232 = vsyncpa [#allocation9], 1
  %233 = vsyncmov [#allocation5]
  %s234 = vpop.sfrf %233
  %p235 = scmp.eq.s32.totalorder %s234, 0
  %p236 = pneg %p235
  %238 = shalt.err (%p236)
  %s239 = scalar_lea.sflag [#allocation5], 1
  %240 = vsyncmov %s239
  %s241 = vpop.sfrf %240
  %p242 = scmp.eq.s32.totalorder %s241, 0
  %p243 = pneg %p242
  %245 = shalt.err (%p243)
  %s246 = scalar_lea.sflag [#allocation5], 2
  %247 = vsyncmov %s246
  %s248 = vpop.sfrf %247
  %p249 = scmp.eq.s32.totalorder %s248, 0
  %p250 = pneg %p249
  %252 = shalt.err (%p250)
  %s253 = scalar_lea.sflag [#allocation5], 3
  %254 = vsyncmov %s253
  %s255 = vpop.sfrf %254
  %p256 = scmp.eq.s32.totalorder %s255, 0
  %p257 = pneg %p256
  %259 = shalt.err (%p257)
  %s260 = scalar_lea.sflag [#allocation5], 4
  %261 = vsyncmov %s260
  %s262 = vpop.sfrf %261
  %p263 = scmp.eq.s32.totalorder %s262, 0
  %p264 = pneg %p263
  %266 = shalt.err (%p264)
  %s267 = scalar_lea.sflag [#allocation5], 5
  %268 = vsyncmov %s267
  %s269 = vpop.sfrf %268
  %p270 = scmp.eq.s32.totalorder %s269, 0
  %p271 = pneg %p270
  %273 = shalt.err (%p271)
  %s274 = scalar_lea.sflag [#allocation5], 6
  %275 = vsyncmov %s274
  %s276 = vpop.sfrf %275
  %p277 = scmp.eq.s32.totalorder %s276, 0
  %p278 = pneg %p277
  %280 = shalt.err (%p278)
  %s281 = scalar_lea.sflag [#allocation5], 7
  %282 = vsyncmov %s281
  %s283 = vpop.sfrf %282
  %p284 = scmp.eq.s32.totalorder %s283, 0
  %p285 = pneg %p284
  %287 = shalt.err (%p285)
  %288 = vsyncmov [#allocation6]
  %s289 = vpop.sfrf %288
  %p290 = scmp.eq.s32.totalorder %s289, 0
  %p291 = pneg %p290
  %293 = shalt.err (%p291)
  %s294 = scalar_lea.sflag [#allocation6], 1
  %295 = vsyncmov %s294
  %s296 = vpop.sfrf %295
  %p297 = scmp.eq.s32.totalorder %s296, 0
  %p298 = pneg %p297
  %300 = shalt.err (%p298)

</llo_original>
